<compile_context>
chip_gen: v7x
topology: tpu7x:2x2x1
jax: 0.10.0
libtpu: 0.0.40
codegen_flags: <defaults>
</compile_context>

<pallas_src>
import functools

import jax
import jax.numpy as jnp
import numpy as np
from jax.experimental import pallas as pl
from jax.experimental.pallas import tpu as pltpu

# ----------------------- small Gemma3-like projector config -----------------------
BATCH = 16
B_TILE = 8                                   # -> projection M = B_TILE * T = 128 rows
PATCHES_PER_IMAGE = 8                        # image_size // patch_size
MM_TOKENS_PER_IMAGE = 16
TOKENS_PER_SIDE = int(MM_TOKENS_PER_IMAGE ** 0.5)            # 4
POOL_K = PATCHES_PER_IMAGE // TOKENS_PER_SIDE                # AvgPool2d kernel/stride = 2
NUM_PATCHES = PATCHES_PER_IMAGE * PATCHES_PER_IMAGE          # 64
NUM_TOKENS = TOKENS_PER_SIDE * TOKENS_PER_SIDE               # 16
VISION_HIDDEN = 128                          # vision_config.hidden_size (lane-aligned)
TEXT_HIDDEN = 256                            # text_config.hidden_size (lane-aligned)
RMS_EPS = 1e-6                               # vision_config.layer_norm_eps


# --------------------------------- fused kernel ---------------------------------
def _projector_kernel(x_ref, pool_ref, proj_ref, o_ref, *, eps):
    # x_ref    : (B_TILE, P, C)  vision features for B_TILE batch elements
    # pool_ref : (T, P)          constant avg-pool matrix, bf16
    # proj_ref : (C, D)          mm_input_projection_weight with (1 + rms weight)
    #                            pre-folded, bf16
    # o_ref    : (B_TILE, T, D)
    bt, p, c = x_ref.shape
    t = pool_ref.shape[0]
    d = proj_ref.shape[1]

    # bf16 MXU operands, f32 accumulation.
    xb = x_ref[...].astype(jnp.bfloat16)                       # (B_TILE, P, C)
    pool_b = jnp.broadcast_to(pool_ref[...], (bt, t, p))       # tiny constant bcast

    # AvgPool2d(kernel=stride=k) over the patch grid, expressed as a batched matmul.
    pooled = jnp.einsum('btp,bpc->btc', pool_b, xb,
                        preferred_element_type=jnp.float32)    # (B_TILE, T, C) f32

    # Gemma3RMSNorm: x * rsqrt(mean(x^2) + eps); the (1 + weight) gain is folded
    # into proj_ref on the host.  Kept in f32 (rsqrt -> EUP).
    var = jnp.mean(pooled * pooled, axis=-1, keepdims=True)
    normed = pooled * jax.lax.rsqrt(var + eps)

    # Projection to text hidden size, MXU-filling shape (B_TILE*T, C) @ (C, D).
    normed2 = normed.reshape(bt * t, c).astype(jnp.bfloat16)
    out = jnp.dot(normed2, proj_ref[...], preferred_element_type=jnp.float32)
    o_ref[...] = out.reshape(bt, t, d).astype(o_ref.dtype)


def make_pool_matrix(pp, ts, k):
    """(T, P) matrix so that A @ x == AvgPool2d(k, k) over the (pp, pp) patch grid."""
    T, P = ts * ts, pp * pp
    A = np.zeros((T, P), np.float32)
    inv = 1.0 / (k * k)
    for ti in range(ts):
        for tj in range(ts):
            tok = ti * ts + tj
            for di in range(k):
                for dj in range(k):
                    A[tok, (ti * k + di) * pp + (tj * k + dj)] = inv
    return jnp.asarray(A)


@jax.jit
def gemma3_multimodal_projector(vision_outputs, norm_weight, proj_weight, pool_matrix):
    B, P, C = vision_outputs.shape
    T = pool_matrix.shape[0]
    D = proj_weight.shape[1]
    assert B % B_TILE == 0, "batch must be divisible by B_TILE"

    # Fold the RMSNorm (1 + weight) gain into the projection weight (exact: a
    # per-channel scale commutes with the C contraction) and pre-cast the
    # constants to bf16 once on the host side of the kernel.
    proj_folded = ((1.0 + norm_weight.astype(jnp.float32))[:, None]
                   * proj_weight.astype(jnp.float32)).astype(jnp.bfloat16)
    pool_bf16 = pool_matrix.astype(jnp.bfloat16)

    itemsize = jnp.dtype(vision_outputs.dtype).itemsize
    flops = 2 * B * T * P * C + 2 * B * T * C * D
    bytes_accessed = (B * P * C * itemsize        # x
                      + T * P * 2                 # pool matrix (bf16)
                      + C * D * 2                 # projection weight (bf16)
                      + B * T * D * itemsize)     # output

    kernel = functools.partial(_projector_kernel, eps=RMS_EPS)
    return pl.pallas_call(
        kernel,
        grid=(B // B_TILE,),
        in_specs=[
            pl.BlockSpec((B_TILE, P, C), lambda b: (b, 0, 0)),
            pl.BlockSpec((T, P), lambda b: (0, 0)),        # constant -> fetched once
            pl.BlockSpec((C, D), lambda b: (0, 0)),        # constant -> fetched once
        ],
        out_specs=pl.BlockSpec((B_TILE, T, D), lambda b: (b, 0, 0)),
        out_shape=jax.ShapeDtypeStruct((B, T, D), vision_outputs.dtype),
        compiler_params=pltpu.CompilerParams(dimension_semantics=("parallel",)),
        cost_estimate=pl.CostEstimate(flops=flops, transcendentals=B * T,
                                      bytes_accessed=bytes_accessed),
    )(vision_outputs, pool_bf16, proj_folded)


# ------------------------- pure-JAX reference (torch semantics) -------------------------
def reference_forward(vision_outputs, norm_weight, proj_weight, pp, ts, k, eps):
    B, P, C = vision_outputs.shape
    hi = jax.lax.Precision.HIGHEST
    r = jnp.transpose(vision_outputs, (0, 2, 1)).reshape(B, C, pp, pp)
    pooled = r.reshape(B, C, ts, k, ts, k).mean(axis=(3, 5))          # AvgPool2d(k, k)
    pooled = pooled.reshape(B, C, ts * ts).transpose(0, 2, 1)         # (B, T, C)
    x = pooled.astype(jnp.float32)
    var = jnp.mean(x * x, axis=-1, keepdims=True)
    normed = x * jax.lax.rsqrt(var + eps) * (1.0 + norm_weight.astype(jnp.float32))
    normed = normed.astype(vision_outputs.dtype)
    out = jnp.matmul(normed, proj_weight, precision=hi)
    return out.astype(vision_outputs.dtype)


# ------------------------------------ main ------------------------------------
if __name__ == "__main__":
    key = jax.random.PRNGKey(0)
    k0, k1, k2 = jax.random.split(key, 3)

    vision_outputs = jax.random.normal(
        k0, (BATCH, NUM_PATCHES, VISION_HIDDEN), jnp.float32)
    norm_weight = 0.1 * jax.random.normal(k1, (VISION_HIDDEN,), jnp.float32)
    proj_weight = jax.random.normal(
        k2, (VISION_HIDDEN, TEXT_HIDDEN), jnp.float32) * (1.0 / np.sqrt(VISION_HIDDEN))

    pool_matrix = make_pool_matrix(PATCHES_PER_IMAGE, TOKENS_PER_SIDE, POOL_K)

    out = gemma3_multimodal_projector(vision_outputs, norm_weight, proj_weight,
                                      pool_matrix)
    out = jax.block_until_ready(out)

    ref = reference_forward(vision_outputs, norm_weight, proj_weight,
                            PATCHES_PER_IMAGE, TOKENS_PER_SIDE, POOL_K, RMS_EPS)

    assert out.shape == (BATCH, MM_TOKENS_PER_IMAGE, TEXT_HIDDEN)
    # Kernel runs the matmuls with bf16 MXU operands / f32 accumulation, so it is
    # not bit-identical to the f32 HIGHEST-precision reference.
    np.testing.assert_allclose(np.asarray(out), np.asarray(ref),
                               rtol=2e-2, atol=2e-2)

    print("KERNEL_OK")
</pallas_src>

<mosaic_0001>
module attributes {stable_mosaic.version = 11 : i64} {
  func.func @_projector_kernel(%arg0: i32, %arg1: memref<8x64x128xf32, #tpu.memory_space<vmem>>, %arg2: memref<16x64xbf16, #tpu.memory_space<vmem>>, %arg3: memref<128x256xbf16, #tpu.memory_space<vmem>>, %arg4: memref<8x16x256xf32, #tpu.memory_space<vmem>>) attributes {dimension_semantics = [#tpu.dimension_semantics<parallel>], iteration_bounds = array<i64: 2>, scalar_prefetch = 0 : i64, scratch_operands = 0 : i64, tpu.core_type = #tpu.core_type<tc>, window_params = [{transform_indices = @transform_0, window_bounds = array<i64: 8, 64, 128>}, {pipeline_mode = #tpu.pipeline_mode<synchronous>, transform_indices = @transform_1, window_bounds = array<i64: 16, 64>}, {pipeline_mode = #tpu.pipeline_mode<synchronous>, transform_indices = @transform_2, window_bounds = array<i64: 128, 256>}, {transform_indices = @transform_3, window_bounds = array<i64: 8, 16, 256>}]} {
    %c0 = arith.constant 0 : index
    %c0_0 = arith.constant 0 : index
    %c0_1 = arith.constant 0 : index
    %0 = vector.load %arg1[%c0, %c0_0, %c0_1] : memref<8x64x128xf32, #tpu.memory_space<vmem>>, vector<8x64x128xf32>
    %1 = arith.truncf %0 : vector<8x64x128xf32> to vector<8x64x128xbf16>
    %c0_2 = arith.constant 0 : index
    %c0_3 = arith.constant 0 : index
    %2 = vector.load %arg2[%c0_2, %c0_3] : memref<16x64xbf16, #tpu.memory_space<vmem>>, vector<16x64xbf16>
    %3 = vector.shape_cast %2 : vector<16x64xbf16> to vector<1x16x64xbf16>
    %4 = vector.broadcast %3 : vector<1x16x64xbf16> to vector<8x16x64xbf16>
    "tpu.trace_start"() <{level = 10 : i32, message = "btp,bpc->btc"}> : () -> ()
    %cst = arith.constant dense<0.000000e+00> : vector<8x16x128xf32>
    %5 = tpu.matmul %4, %1, %cst {dimension_numbers = #tpu.dot_dimension_numbers<[2], [1], [1], [2], [0, 0, 0, 1, 1, 2], [0], [0]>} : vector<8x16x64xbf16>, vector<8x64x128xbf16>, vector<8x16x128xf32> -> vector<8x16x128xf32>
    "tpu.trace_stop"() : () -> ()
    %6 = arith.mulf %5, %5 : vector<8x16x128xf32>
    %cst_4 = arith.constant dense<0.000000e+00> : vector<8x16xf32>
    %7 = vector.multi_reduction <add>, %6, %cst_4 [2] : vector<8x16x128xf32> to vector<8x16xf32>
    %8 = vector.shape_cast %7 : vector<8x16xf32> to vector<8x16x1xf32>
    %cst_5 = arith.constant 1.280000e+02 : f32
    %9 = vector.broadcast %cst_5 : f32 to vector<8x16x1xf32>
    %10 = arith.divf %8, %9 : vector<8x16x1xf32>
    %cst_6 = arith.constant 9.99999997E-7 : f32
    %11 = vector.broadcast %cst_6 : f32 to vector<8x16x1xf32>
    %12 = arith.addf %10, %11 : vector<8x16x1xf32>
    %13 = math.rsqrt %12 : vector<8x16x1xf32>
    %14 = vector.broadcast %13 : vector<8x16x1xf32> to vector<8x16x128xf32>
    %15 = arith.mulf %5, %14 : vector<8x16x128xf32>
    %16 = vector.shape_cast %15 : vector<8x16x128xf32> to vector<128x128xf32>
    %17 = arith.truncf %16 : vector<128x128xf32> to vector<128x128xbf16>
    %c0_7 = arith.constant 0 : index
    %c0_8 = arith.constant 0 : index
    %18 = vector.load %arg3[%c0_7, %c0_8] : memref<128x256xbf16, #tpu.memory_space<vmem>>, vector<128x256xbf16>
    %cst_9 = arith.constant dense<0.000000e+00> : vector<128x256xf32>
    %19 = tpu.matmul %17, %18, %cst_9 {dimension_numbers = #tpu.dot_dimension_numbers<[1], [0], [0], [1], [0, 0, 1, 1], [], []>} : vector<128x128xbf16>, vector<128x256xbf16>, vector<128x256xf32> -> vector<128x256xf32>
    %20 = vector.shape_cast %19 : vector<128x256xf32> to vector<8x16x256xf32>
    %c0_10 = arith.constant 0 : index
    %c0_11 = arith.constant 0 : index
    %c0_12 = arith.constant 0 : index
    %21 = vector.load %arg4[%c0_10, %c0_11, %c0_12] : memref<8x16x256xf32, #tpu.memory_space<vmem>>, vector<8x16x256xf32>
    tpu.vector_store %arg4[%c0_10, %c0_11, %c0_12], %20 {strides = array<i32>} : memref<8x16x256xf32, #tpu.memory_space<vmem>>, vector<8x16x256xf32>,
    return
  }
  func.func @transform_0(%arg0: i32) -> (i32, i32, i32) {
    %c0_i32 = arith.constant 0 : i32
    %c0_i32_0 = arith.constant 0 : i32
    %c0_i32_1 = arith.constant 0 : i32
    return %arg0, %c0_i32, %c0_i32_0 : i32, i32, i32
  }
  func.func @transform_1(%arg0: i32) -> (i32, i32) {
    %c0_i32 = arith.constant 0 : i32
    %c0_i32_0 = arith.constant 0 : i32
    %c0_i32_1 = arith.constant 0 : i32
    return %c0_i32, %c0_i32_0 : i32, i32
  }
  func.func @transform_2(%arg0: i32) -> (i32, i32) {
    %c0_i32 = arith.constant 0 : i32
    %c0_i32_0 = arith.constant 0 : i32
    %c0_i32_1 = arith.constant 0 : i32
    return %c0_i32, %c0_i32_0 : i32, i32
  }
  func.func @transform_3(%arg0: i32) -> (i32, i32, i32) {
    %c0_i32 = arith.constant 0 : i32
    %c0_i32_0 = arith.constant 0 : i32
    %c0_i32_1 = arith.constant 0 : i32
    return %arg0, %c0_i32, %c0_i32_0 : i32, i32, i32
  }
}

</mosaic_0001>

<llo_original>
// kernel: gemma3_multimodal_projector.1
$region0: #{gemma3_multimodal_projector.1}
  #allocation0 [shape = 'u32[]', space=smem, size = 0x4, offset = 0x4, fixed_abs, tag = 'smem constant byte address 0x4 - core index']
  #allocation1 [shape = 'u32[144,128]{1,0:T(1,128)}', space=vmem, size = 0x12000, scoped, tag = 'internal scratch']
  %s0 = inlined_call_operand.hbm [shape: f32[16,64,128], index: 0, kind: input, shape index: {}]
  %s1 = inlined_call_operand.vmem [shape: bf16[16,64], index: 1, kind: input, shape index: {}]
  %s2 = inlined_call_operand.vmem [shape: bf16[128,256], index: 2, kind: input, shape index: {}]
  %s3 = inlined_call_operand.hbm [shape: f32[16,16,256], index: 3, kind: output, shape index: {}]
  %s4 = sld [smem:[#allocation0]]
  $region49: #{gemma3_multimodal_projector.1} parent=0
    _
  %s6 = ssub.s32 1, %s4
  %s7 = scalar_select 0, %s6, %s4
  $region1: #{gemma3_multimodal_projector.1} parent=0
    #allocation2 [shape = 'u8[524288]{0}', space=vmem, size = 0x80000, scoped, tag = 'input window, operand 0']
    #allocation3 [shape = 's32[2]{0}', space=sflag, size = 0x8, scoped, tag = 'scoped memory for gemma3_multimodal_projector.1']
    #allocation4 [shape = 's32[2]{0}', space=sflag, size = 0x8, scoped, tag = 'scoped memory for gemma3_multimodal_projector.1']
    #allocation5 [shape = 'u8[262144]{0}', space=vmem, size = 0x40000, scoped, tag = 'output window, operand 0']
    %8 = vsyncpa [#allocation3], 0
    %s9 = scalar_lea.sflag [#allocation3], 1
    %10 = vsyncpa %s9, 0
    %11 = vsyncpa [#allocation4], 0
    %s12 = scalar_lea.sflag [#allocation4], 1
    %13 = vsyncpa %s12, 0
    loop: start=0, step=1, limit=4
    $region2: #{gemma3_multimodal_projector.1} parent=1 // loop_pre_header
      _
    $region3: #{gemma3_multimodal_projector.1} parent=1 // loop_header
      %s15 = sphi 0, %s19
      %p16 = scmp.ge.s32.totalorder %s15, 4
      %s25 = sphi 0, %s27
      %s28 = sphi 0, %s25
      %s29 = sphi 0, %s28
      %s45 = sphi 0, %s29
      %s49 = sphi 0, %s49
      %s51 = sphi 0, %s49
      %s52 = sphi 0, %s51
      %s66 = sphi 0, %s52
      %s70 = sphi 0, %s70
      %s72 = sphi 0, %s70
      %s73 = sphi 0, %s72
      %s87 = sphi 0, %s73
      %s93 = sphi 0, %s95
      %s96 = sphi 0, %s93
      %s97 = sphi 0, %s96
      %s113 = sphi 0, %s97
    $region4: #{gemma3_multimodal_projector.1} parent=1 // loop_header_branch
      %18 = sbr.rel (%p16) target = $region8
    $region5: #{gemma3_multimodal_projector.1} parent=1 // loop_body
      %s20 = ssub.s32 %s15, 1
      %s21 = ssub.s32 %s15, 2
      %s22 = sadd.s32 %s15, 1
      %s23 = ssub.s32 %s15, %s22
      %p24 = scmp.eq.s32.totalorder %s23, 0
      %s26 = sadd.s32 %s25, 1
      %s27 = scalar_select %p24, %s25, %s26
      %p30 = pneg %p24
      %p31 = scmp.eq.s32.totalorder %s15, 1
      %p32 = por %p30, %p31
      %p33 = scmp.ne.s32.totalorder %s25, %s28
      %p34 = scmp.eq.s32.totalorder %s15, 0
      %p35 = por %p33, %p34
      %p36 = scmp.ne.s32.totalorder %s25, %s28
      %p37 = scmp.eq.s32.totalorder %s20, 1
      %p38 = por %p36, %p37
      %p39 = scmp.ne.s32.totalorder %s28, %s29
      %p40 = scmp.eq.s32.totalorder %s20, 0
      %p41 = por %p39, %p40
      %p42 = scmp.ne.s32.totalorder %s28, %s29
      %p43 = scmp.eq.s32.totalorder %s21, 1
      %p44 = por %p42, %p43
      %p46 = scmp.ne.s32.totalorder %s29, %s45
      %p47 = scmp.eq.s32.totalorder %s21, 0
      %p48 = por %p46, %p47
      %s50 = sadd.s32 %s49, 1
      %p53 = scmp.eq.s32.totalorder %s15, 1
      %p54 = scmp.ne.s32.totalorder %s49, %s51
      %p55 = scmp.eq.s32.totalorder %s15, 0
      %p56 = por %p54, %p55
      %p57 = scmp.ne.s32.totalorder %s49, %s51
      %p58 = scmp.eq.s32.totalorder %s20, 1
      %p59 = por %p57, %p58
      %p60 = scmp.ne.s32.totalorder %s51, %s52
      %p61 = scmp.eq.s32.totalorder %s20, 0
      %p62 = por %p60, %p61
      %p63 = scmp.ne.s32.totalorder %s51, %s52
      %p64 = scmp.eq.s32.totalorder %s21, 1
      %p65 = por %p63, %p64
      %p67 = scmp.ne.s32.totalorder %s52, %s66
      %p68 = scmp.eq.s32.totalorder %s21, 0
      %p69 = por %p67, %p68
      %s71 = sadd.s32 %s70, 1
      %p74 = scmp.eq.s32.totalorder %s15, 1
      %p75 = scmp.ne.s32.totalorder %s70, %s72
      %p76 = scmp.eq.s32.totalorder %s15, 0
      %p77 = por %p75, %p76
      %p78 = scmp.ne.s32.totalorder %s70, %s72
      %p79 = scmp.eq.s32.totalorder %s20, 1
      %p80 = por %p78, %p79
      %p81 = scmp.ne.s32.totalorder %s72, %s73
      %p82 = scmp.eq.s32.totalorder %s20, 0
      %p83 = por %p81, %p82
      %p84 = scmp.ne.s32.totalorder %s72, %s73
      %p85 = scmp.eq.s32.totalorder %s21, 1
      %p86 = por %p84, %p85
      %p88 = scmp.ne.s32.totalorder %s73, %s87
      %p89 = scmp.eq.s32.totalorder %s21, 0
      %p90 = por %p88, %p89
      %s91 = ssub.s32 %s15, %s22
      %p92 = scmp.eq.s32.totalorder %s91, 0
      %s94 = sadd.s32 %s93, 1
      %s95 = scalar_select %p92, %s93, %s94
      %p98 = pneg %p92
      %p99 = scmp.eq.s32.totalorder %s15, 1
      %p100 = por %p98, %p99
      %p101 = scmp.ne.s32.totalorder %s93, %s96
      %p102 = scmp.eq.s32.totalorder %s15, 0
      %p103 = por %p101, %p102
      %p104 = scmp.ne.s32.totalorder %s93, %s96
      %p105 = scmp.eq.s32.totalorder %s20, 1
      %p106 = por %p104, %p105
      %p107 = scmp.ne.s32.totalorder %s96, %s97
      %p108 = scmp.eq.s32.totalorder %s20, 0
      %p109 = por %p107, %p108
      %p110 = scmp.ne.s32.totalorder %s96, %s97
      %p111 = scmp.eq.s32.totalorder %s21, 1
      %p112 = por %p110, %p111
      %p114 = scmp.ne.s32.totalorder %s97, %s113
      %p115 = scmp.eq.s32.totalorder %s21, 0
      %p116 = por %p114, %p115
      %p117 = scmp.le.s32.totalorder 1, %s15
      %p118 = scmp.lt.s32.totalorder %s15, 3
      %p119 = pnand %p117, %p118
      %p120 = pneg %p119
      // Predicated region
      $region9: #{gemma3_multimodal_projector.1} parent=5 // pred_check
        _
      $region10: #{gemma3_multimodal_projector.1} parent=5 // pred_check_branch
        %122 = sbr.rel (%p119) target = $region12
      $region11: #{gemma3_multimodal_projector.1} parent=5 // pred_region
        %s123 = ssub.s32 %s15, 1
        // Predicated region
        $region13: #{gemma3_multimodal_projector.1} parent=11 // pred_check
          %p124 = pneg %p62
        $region14: #{gemma3_multimodal_projector.1} parent=11 // pred_check_branch
          %126 = sbr.rel (%p124) target = $region16
        $region15: #{gemma3_multimodal_projector.1} parent=11 // pred_region
          _
        $region16: #{gemma3_multimodal_projector.1} parent=11 // pred_fallthru
          _
        // Predicated region
        $region17: #{gemma3_multimodal_projector.1} parent=11 // pred_check
          %p127 = pneg %p83
        $region18: #{gemma3_multimodal_projector.1} parent=11 // pred_check_branch
          %129 = sbr.rel (%p127) target = $region20
        $region19: #{gemma3_multimodal_projector.1} parent=11 // pred_region
          _
        $region20: #{gemma3_multimodal_projector.1} parent=11 // pred_fallthru
          _
      $region12: #{gemma3_multimodal_projector.1} parent=5 // pred_fallthru
        _
      %p130 = scmp.lt.s32.totalorder %s15, 2
      // Predicated region
      $region21: #{gemma3_multimodal_projector.1} parent=5 // pred_check
        %p131 = pneg %p130
      $region22: #{gemma3_multimodal_projector.1} parent=5 // pred_check_branch
        %133 = sbr.rel (%p131) target = $region24
      $region23: #{gemma3_multimodal_projector.1} parent=5 // pred_region
        // Predicated region
        $region25: #{gemma3_multimodal_projector.1} parent=23 // pred_check
          %p134 = pneg %p35
        $region26: #{gemma3_multimodal_projector.1} parent=23 // pred_check_branch
          %136 = sbr.rel (%p134) target = $region28
        $region27: #{gemma3_multimodal_projector.1} parent=23 // pred_region
          %s137 = sand.u32 %s25, 1
          %s138 = scalar_lea.sflag [#allocation3], %s137
          %s139 = sand.u32 %s25, 1
          %s140 = smul.addr %s139, 512
          %s141 = scalar_lea.vmem [#allocation2], %s140
          %s142 = smul.u32 8, %s15
          %s144 = ssub.s32 8192, 8192
          %145 = vsyncadd %s138, %s144
          %s146 = smul.addr %s142, 8
          %s147 = smul.addr %s146, 128
          %s148 = scalar_lea.hbm %s0, %s147
          %s149 = sshll.u32 %s141, 4
          %s150 = int_to_ptr.vmem [resolvable:$true] %s149
          %155 = dma.hbm_to_vmem [thread:$0]  %s148, 8192, %s150, %s138, 128, 128, 8
        $region28: #{gemma3_multimodal_projector.1} parent=23 // pred_fallthru
          _
      $region24: #{gemma3_multimodal_projector.1} parent=5 // pred_fallthru
        _
      %p156 = scmp.le.s32.totalorder 1, %s15
      %p157 = scmp.lt.s32.totalorder %s15, 3
      %p158 = pnand %p156, %p157
      %p159 = pneg %p158
      // Predicated region
      $region29: #{gemma3_multimodal_projector.1} parent=5 // pred_check
        _
      $region30: #{gemma3_multimodal_projector.1} parent=5 // pred_check_branch
        %161 = sbr.rel (%p158) target = $region32
      $region31: #{gemma3_multimodal_projector.1} parent=5 // pred_region
        %s162 = ssub.s32 %s15, 1
        %s163 = sand.u32 %s28, 1
        %s164 = scalar_lea.sflag [#allocation3], %s163
        %s165 = sand.u32 %s28, 1
        %s166 = smul.addr %s165, 512
        %s167 = scalar_lea.vmem [#allocation2], %s166
        // Predicated region
        $region33: #{gemma3_multimodal_projector.1} parent=31 // pred_check
          %p168 = pneg %p41
        $region34: #{gemma3_multimodal_projector.1} parent=31 // pred_check_branch
          %170 = sbr.rel (%p168) target = $region36
        $region35: #{gemma3_multimodal_projector.1} parent=31 // pred_region
          %171 = dma.done %s164, 8192
        $region36: #{gemma3_multimodal_projector.1} parent=31 // pred_fallthru
          _
        %s172 = sand.u32 %s28, 1
        %s173 = scalar_lea.sflag [#allocation3], %s172
        %s174 = sand.u32 %s28, 1
        %s175 = smul.addr %s174, 512
        %s176 = scalar_lea.vmem [#allocation2], %s175
        %p177 = pneg %p41
        %p178 = pneg %p38
        %p179 = pneg %p62
        %p180 = pneg %p59
        %p181 = pneg %p83
        %p182 = pneg %p80
        %p183 = pneg %p109
        %p184 = pneg %p106
        %s185 = sand.u32 %s96, 1
        %s186 = scalar_lea.sflag [#allocation4], %s185
        %s187 = sand.u32 %s96, 1
        %s188 = smul.addr %s187, 256
        %s189 = scalar_lea.vmem [#allocation5], %s188
        %s190 = smul.u32 8, %s20
        %s191 = smul.u32 8, %s20
        %v193 = vld [vmem:[%s167] sm:$0xff]
        %v194 = vld [vmem:[%s167 + $0x8] sm:$0xff]
        %v195 = vld [vmem:[%s167 + $0x10] sm:$0xff]
        %v196 = vld [vmem:[%s167 + $0x18] sm:$0xff]
        %v197 = vld [vmem:[%s167 + $0x20] sm:$0xff]
        %v198 = vld [vmem:[%s167 + $0x28] sm:$0xff]
        %v199 = vld [vmem:[%s167 + $0x30] sm:$0xff]
        %v200 = vld [vmem:[%s167 + $0x38] sm:$0xff]
        %v201 = vld [vmem:[%s167 + $0x40] sm:$0xff]
        %v202 = vld [vmem:[%s167 + $0x48] sm:$0xff]
        %v203 = vld [vmem:[%s167 + $0x50] sm:$0xff]
        %v204 = vld [vmem:[%s167 + $0x58] sm:$0xff]
        %v205 = vld [vmem:[%s167 + $0x60] sm:$0xff]
        %v206 = vld [vmem:[%s167 + $0x68] sm:$0xff]
        %v207 = vld [vmem:[%s167 + $0x70] sm:$0xff]
        %v208 = vld [vmem:[%s167 + $0x78] sm:$0xff]
        %v209 = vld [vmem:[%s167 + $0x80] sm:$0xff]
        %v210 = vld [vmem:[%s167 + $0x88] sm:$0xff]
        %v211 = vld [vmem:[%s167 + $0x90] sm:$0xff]
        %v212 = vld [vmem:[%s167 + $0x98] sm:$0xff]
        %v213 = vld [vmem:[%s167 + $0xa0] sm:$0xff]
        %v214 = vld [vmem:[%s167 + $0xa8] sm:$0xff]
        %v215 = vld [vmem:[%s167 + $0xb0] sm:$0xff]
        %v216 = vld [vmem:[%s167 + $0xb8] sm:$0xff]
        %v217 = vld [vmem:[%s167 + $0xc0] sm:$0xff]
        %v218 = vld [vmem:[%s167 + $0xc8] sm:$0xff]
        %v219 = vld [vmem:[%s167 + $0xd0] sm:$0xff]
        %v220 = vld [vmem:[%s167 + $0xd8] sm:$0xff]
        %v221 = vld [vmem:[%s167 + $0xe0] sm:$0xff]
        %v222 = vld [vmem:[%s167 + $0xe8] sm:$0xff]
        %v223 = vld [vmem:[%s167 + $0xf0] sm:$0xff]
        %v224 = vld [vmem:[%s167 + $0xf8] sm:$0xff]
        %v225 = vld [vmem:[%s167 + $0x100] sm:$0xff]
        %v226 = vld [vmem:[%s167 + $0x108] sm:$0xff]
        %v227 = vld [vmem:[%s167 + $0x110] sm:$0xff]
        %v228 = vld [vmem:[%s167 + $0x118] sm:$0xff]
        %v229 = vld [vmem:[%s167 + $0x120] sm:$0xff]
        %v230 = vld [vmem:[%s167 + $0x128] sm:$0xff]
        %v231 = vld [vmem:[%s167 + $0x130] sm:$0xff]
        %v232 = vld [vmem:[%s167 + $0x138] sm:$0xff]
        %v233 = vld [vmem:[%s167 + $0x140] sm:$0xff]
        %v234 = vld [vmem:[%s167 + $0x148] sm:$0xff]
        %v235 = vld [vmem:[%s167 + $0x150] sm:$0xff]
        %v236 = vld [vmem:[%s167 + $0x158] sm:$0xff]
        %v237 = vld [vmem:[%s167 + $0x160] sm:$0xff]
        %v238 = vld [vmem:[%s167 + $0x168] sm:$0xff]
        %v239 = vld [vmem:[%s167 + $0x170] sm:$0xff]
        %v240 = vld [vmem:[%s167 + $0x178] sm:$0xff]
        %v241 = vld [vmem:[%s167 + $0x180] sm:$0xff]
        %v242 = vld [vmem:[%s167 + $0x188] sm:$0xff]
        %v243 = vld [vmem:[%s167 + $0x190] sm:$0xff]
        %v244 = vld [vmem:[%s167 + $0x198] sm:$0xff]
        %v245 = vld [vmem:[%s167 + $0x1a0] sm:$0xff]
        %v246 = vld [vmem:[%s167 + $0x1a8] sm:$0xff]
        %v247 = vld [vmem:[%s167 + $0x1b0] sm:$0xff]
        %v248 = vld [vmem:[%s167 + $0x1b8] sm:$0xff]
        %v249 = vld [vmem:[%s167 + $0x1c0] sm:$0xff]
        %v250 = vld [vmem:[%s167 + $0x1c8] sm:$0xff]
        %v251 = vld [vmem:[%s167 + $0x1d0] sm:$0xff]
        %v252 = vld [vmem:[%s167 + $0x1d8] sm:$0xff]
        %v253 = vld [vmem:[%s167 + $0x1e0] sm:$0xff]
        %v254 = vld [vmem:[%s167 + $0x1e8] sm:$0xff]
        %v255 = vld [vmem:[%s167 + $0x1f0] sm:$0xff]
        %v256 = vld [vmem:[%s167 + $0x1f8] sm:$0xff]
        %v257 = vpack.c.bf16 %v194, %v193
        %v258 = vpack.c.bf16 %v196, %v195
        %v259 = vpack.c.bf16 %v198, %v197
        %v260 = vpack.c.bf16 %v200, %v199
        %v261 = vpack.c.bf16 %v202, %v201
        %v262 = vpack.c.bf16 %v204, %v203
        %v263 = vpack.c.bf16 %v206, %v205
        %v264 = vpack.c.bf16 %v208, %v207
        %v265 = vpack.c.bf16 %v210, %v209
        %v266 = vpack.c.bf16 %v212, %v211
        %v267 = vpack.c.bf16 %v214, %v213
        %v268 = vpack.c.bf16 %v216, %v215
        %v269 = vpack.c.bf16 %v218, %v217
        %v270 = vpack.c.bf16 %v220, %v219
        %v271 = vpack.c.bf16 %v222, %v221
        %v272 = vpack.c.bf16 %v224, %v223
        %v273 = vpack.c.bf16 %v226, %v225
        %v274 = vpack.c.bf16 %v228, %v227
        %v275 = vpack.c.bf16 %v230, %v229
        %v276 = vpack.c.bf16 %v232, %v231
        %v277 = vpack.c.bf16 %v234, %v233
        %v278 = vpack.c.bf16 %v236, %v235
        %v279 = vpack.c.bf16 %v238, %v237
        %v280 = vpack.c.bf16 %v240, %v239
        %v281 = vpack.c.bf16 %v242, %v241
        %v282 = vpack.c.bf16 %v244, %v243
        %v283 = vpack.c.bf16 %v246, %v245
        %v284 = vpack.c.bf16 %v248, %v247
        %v285 = vpack.c.bf16 %v250, %v249
        %v286 = vpack.c.bf16 %v252, %v251
        %v287 = vpack.c.bf16 %v254, %v253
        %v288 = vpack.c.bf16 %v256, %v255
        %v289 = vld [vmem:[%s1] sm:$0xf]
        %v290 = vld [vmem:[%s1 + $0x4] sm:$0xf]
        %v293 = vunpack.c.l.b16 %v289
        %v294 = vunpack.c.l.b16 %v290
        %v295 = vpack.c.b16 %v294, %v293
        %vm296 = vcmask 523264
        %v298 = vsel %vm296, %v295, 0
        %300 = vmatprep.subr.bf16.mxu0 0
        %301 = vmatpush1.bf16.msra.mxu0 %v257
        %302 = vmatprep.subr.bf16.mxu0 0
        %303 = vmatpush1.bf16.msra.mxu0 %v258
        %304 = vmatprep.subr.bf16.mxu0 0
        %305 = vmatpush1.bf16.msra.mxu0 %v259
        %306 = vmatprep.subr.bf16.mxu0 0
        %307 = vmatpush1.bf16.msra.mxu0 %v260
        %308 = vmatprep.subr.bf16.mxu0 0
        %309 = vmatpush1.bf16.msra.mxu0 0
        %310 = vmatprep.subr.bf16.mxu0 0
        %311 = vmatpush1.bf16.msra.mxu0 0
        %312 = vmatprep.subr.bf16.mxu0 0
        %313 = vmatpush1.bf16.msra.mxu0 0
        %314 = vmatprep.subr.bf16.mxu0 0
        %315 = vmatpush1.bf16.msra.mxu0 0
        %316 = vmatprep.subr.bf16.mxu0 0
        %317 = vmatpush1.bf16.msra.mxu0 0
        %318 = vmatprep.subr.bf16.mxu0 0
        %319 = vmatpush1.bf16.msra.mxu0 0
        %320 = vmatprep.subr.bf16.mxu0 0
        %321 = vmatpush1.bf16.msra.mxu0 0
        %322 = vmatprep.subr.bf16.mxu0 0
        %323 = vmatpush1.bf16.msra.mxu0 0
        %324 = vmatprep.subr.bf16.mxu0 0
        %325 = vmatpush1.bf16.msra.mxu0 0
        %326 = vmatprep.subr.bf16.mxu0 0
        %327 = vmatpush1.bf16.msra.mxu0 0
        %328 = vmatprep.subr.bf16.mxu0 0
        %329 = vmatpush1.bf16.msra.mxu0 0
        %330 = vmatprep.subr.bf16.mxu0 0
        %331 = vmatpush1.bf16.msra.mxu0 0
        %332 = vmatprep.mubr.bf16.mxu0 0
        %333 = vmatmul.mubr.bf16.gmra.mrb[0].mxu0 %v298
        %v334 = vpop.f32.mrb[0].mxu0
        %v335 = vadd.f32 0.0, %v334
        %v336 = vpop.f32.mrb[0].mxu0
        %v337 = vpop.f32.mrb[0].mxu0
        %v338 = vadd.f32 0.0, %v337
        %v339 = vpop.f32.mrb[0].mxu0
        %340 = vdwg.mxu0
        %341 = vmatprep.subr.bf16.mxu0 0
        %342 = vmatpush1.bf16.msra.mxu0 %v261
        %343 = vmatprep.subr.bf16.mxu0 0
        %344 = vmatpush1.bf16.msra.mxu0 %v262
        %345 = vmatprep.subr.bf16.mxu0 0
        %346 = vmatpush1.bf16.msra.mxu0 %v263
        %347 = vmatprep.subr.bf16.mxu0 0
        %348 = vmatpush1.bf16.msra.mxu0 %v264
        %349 = vmatprep.subr.bf16.mxu0 0
        %350 = vmatpush1.bf16.msra.mxu0 0
        %351 = vmatprep.subr.bf16.mxu0 0
        %352 = vmatpush1.bf16.msra.mxu0 0
        %353 = vmatprep.subr.bf16.mxu0 0
        %354 = vmatpush1.bf16.msra.mxu0 0
        %355 = vmatprep.subr.bf16.mxu0 0
        %356 = vmatpush1.bf16.msra.mxu0 0
        %357 = vmatprep.subr.bf16.mxu0 0
        %358 = vmatpush1.bf16.msra.mxu0 0
        %359 = vmatprep.subr.bf16.mxu0 0
        %360 = vmatpush1.bf16.msra.mxu0 0
        %361 = vmatprep.subr.bf16.mxu0 0
        %362 = vmatpush1.bf16.msra.mxu0 0
        %363 = vmatprep.subr.bf16.mxu0 0
        %364 = vmatpush1.bf16.msra.mxu0 0
        %365 = vmatprep.subr.bf16.mxu0 0
        %366 = vmatpush1.bf16.msra.mxu0 0
        %367 = vmatprep.subr.bf16.mxu0 0
        %368 = vmatpush1.bf16.msra.mxu0 0
        %369 = vmatprep.subr.bf16.mxu0 0
        %370 = vmatpush1.bf16.msra.mxu0 0
        %371 = vmatprep.subr.bf16.mxu0 0
        %372 = vmatpush1.bf16.msra.mxu0 0
        %373 = vmatprep.mubr.bf16.mxu0 0
        %374 = vmatmul.mubr.bf16.gmra.mrb[0].mxu0 %v298
        %v375 = vpop.f32.mrb[0].mxu0
        %v376 = vadd.f32 0.0, %v375
        %v377 = vpop.f32.mrb[0].mxu0
        %v378 = vpop.f32.mrb[0].mxu0
        %v379 = vadd.f32 0.0, %v378
        %v380 = vpop.f32.mrb[0].mxu0
        %381 = vdwg.mxu0
        %382 = vmatprep.subr.bf16.mxu0 0
        %383 = vmatpush1.bf16.msra.mxu0 %v265
        %384 = vmatprep.subr.bf16.mxu0 0
        %385 = vmatpush1.bf16.msra.mxu0 %v266
        %386 = vmatprep.subr.bf16.mxu0 0
        %387 = vmatpush1.bf16.msra.mxu0 %v267
        %388 = vmatprep.subr.bf16.mxu0 0
        %389 = vmatpush1.bf16.msra.mxu0 %v268
        %390 = vmatprep.subr.bf16.mxu0 0
        %391 = vmatpush1.bf16.msra.mxu0 0
        %392 = vmatprep.subr.bf16.mxu0 0
        %393 = vmatpush1.bf16.msra.mxu0 0
        %394 = vmatprep.subr.bf16.mxu0 0
        %395 = vmatpush1.bf16.msra.mxu0 0
        %396 = vmatprep.subr.bf16.mxu0 0
        %397 = vmatpush1.bf16.msra.mxu0 0
        %398 = vmatprep.subr.bf16.mxu0 0
        %399 = vmatpush1.bf16.msra.mxu0 0
        %400 = vmatprep.subr.bf16.mxu0 0
        %401 = vmatpush1.bf16.msra.mxu0 0
        %402 = vmatprep.subr.bf16.mxu0 0
        %403 = vmatpush1.bf16.msra.mxu0 0
        %404 = vmatprep.subr.bf16.mxu0 0
        %405 = vmatpush1.bf16.msra.mxu0 0
        %406 = vmatprep.subr.bf16.mxu0 0
        %407 = vmatpush1.bf16.msra.mxu0 0
        %408 = vmatprep.subr.bf16.mxu0 0
        %409 = vmatpush1.bf16.msra.mxu0 0
        %410 = vmatprep.subr.bf16.mxu0 0
        %411 = vmatpush1.bf16.msra.mxu0 0
        %412 = vmatprep.subr.bf16.mxu0 0
        %413 = vmatpush1.bf16.msra.mxu0 0
        %414 = vmatprep.mubr.bf16.mxu0 0
        %415 = vmatmul.mubr.bf16.gmra.mrb[0].mxu0 %v298
        %v416 = vpop.f32.mrb[0].mxu0
        %v417 = vadd.f32 0.0, %v416
        %v418 = vpop.f32.mrb[0].mxu0
        %v419 = vpop.f32.mrb[0].mxu0
        %v420 = vadd.f32 0.0, %v419
        %v421 = vpop.f32.mrb[0].mxu0
        %422 = vdwg.mxu0
        %423 = vmatprep.subr.bf16.mxu0 0
        %424 = vmatpush1.bf16.msra.mxu0 %v269
        %425 = vmatprep.subr.bf16.mxu0 0
        %426 = vmatpush1.bf16.msra.mxu0 %v270
        %427 = vmatprep.subr.bf16.mxu0 0
        %428 = vmatpush1.bf16.msra.mxu0 %v271
        %429 = vmatprep.subr.bf16.mxu0 0
        %430 = vmatpush1.bf16.msra.mxu0 %v272
        %431 = vmatprep.subr.bf16.mxu0 0
        %432 = vmatpush1.bf16.msra.mxu0 0
        %433 = vmatprep.subr.bf16.mxu0 0
        %434 = vmatpush1.bf16.msra.mxu0 0
        %435 = vmatprep.subr.bf16.mxu0 0
        %436 = vmatpush1.bf16.msra.mxu0 0
        %437 = vmatprep.subr.bf16.mxu0 0
        %438 = vmatpush1.bf16.msra.mxu0 0
        %439 = vmatprep.subr.bf16.mxu0 0
        %440 = vmatpush1.bf16.msra.mxu0 0
        %441 = vmatprep.subr.bf16.mxu0 0
        %442 = vmatpush1.bf16.msra.mxu0 0
        %443 = vmatprep.subr.bf16.mxu0 0
        %444 = vmatpush1.bf16.msra.mxu0 0
        %445 = vmatprep.subr.bf16.mxu0 0
        %446 = vmatpush1.bf16.msra.mxu0 0
        %447 = vmatprep.subr.bf16.mxu0 0
        %448 = vmatpush1.bf16.msra.mxu0 0
        %449 = vmatprep.subr.bf16.mxu0 0
        %450 = vmatpush1.bf16.msra.mxu0 0
        %451 = vmatprep.subr.bf16.mxu0 0
        %452 = vmatpush1.bf16.msra.mxu0 0
        %453 = vmatprep.subr.bf16.mxu0 0
        %454 = vmatpush1.bf16.msra.mxu0 0
        %455 = vmatprep.mubr.bf16.mxu0 0
        %456 = vmatmul.mubr.bf16.gmra.mrb[0].mxu0 %v298
        %v457 = vpop.f32.mrb[0].mxu0
        %v458 = vadd.f32 0.0, %v457
        %v459 = vpop.f32.mrb[0].mxu0
        %v460 = vpop.f32.mrb[0].mxu0
        %v461 = vadd.f32 0.0, %v460
        %v462 = vpop.f32.mrb[0].mxu0
        %463 = vdwg.mxu0
        %464 = vmatprep.subr.bf16.mxu0 0
        %465 = vmatpush1.bf16.msra.mxu0 %v273
        %466 = vmatprep.subr.bf16.mxu0 0
        %467 = vmatpush1.bf16.msra.mxu0 %v274
        %468 = vmatprep.subr.bf16.mxu0 0
        %469 = vmatpush1.bf16.msra.mxu0 %v275
        %470 = vmatprep.subr.bf16.mxu0 0
        %471 = vmatpush1.bf16.msra.mxu0 %v276
        %472 = vmatprep.subr.bf16.mxu0 0
        %473 = vmatpush1.bf16.msra.mxu0 0
        %474 = vmatprep.subr.bf16.mxu0 0
        %475 = vmatpush1.bf16.msra.mxu0 0
        %476 = vmatprep.subr.bf16.mxu0 0
        %477 = vmatpush1.bf16.msra.mxu0 0
        %478 = vmatprep.subr.bf16.mxu0 0
        %479 = vmatpush1.bf16.msra.mxu0 0
        %480 = vmatprep.subr.bf16.mxu0 0
        %481 = vmatpush1.bf16.msra.mxu0 0
        %482 = vmatprep.subr.bf16.mxu0 0
        %483 = vmatpush1.bf16.msra.mxu0 0
        %484 = vmatprep.subr.bf16.mxu0 0
        %485 = vmatpush1.bf16.msra.mxu0 0
        %486 = vmatprep.subr.bf16.mxu0 0
        %487 = vmatpush1.bf16.msra.mxu0 0
        %488 = vmatprep.subr.bf16.mxu0 0
        %489 = vmatpush1.bf16.msra.mxu0 0
        %490 = vmatprep.subr.bf16.mxu0 0
        %491 = vmatpush1.bf16.msra.mxu0 0
        %492 = vmatprep.subr.bf16.mxu0 0
        %493 = vmatpush1.bf16.msra.mxu0 0
        %494 = vmatprep.subr.bf16.mxu0 0
        %495 = vmatpush1.bf16.msra.mxu0 0
        %496 = vmatprep.mubr.bf16.mxu0 0
        %497 = vmatmul.mubr.bf16.gmra.mrb[0].mxu0 %v298
        %v498 = vpop.f32.mrb[0].mxu0
        %v499 = vadd.f32 0.0, %v498
        %v500 = vpop.f32.mrb[0].mxu0
        %v501 = vpop.f32.mrb[0].mxu0
        %v502 = vadd.f32 0.0, %v501
        %v503 = vpop.f32.mrb[0].mxu0
        %504 = vdwg.mxu0
        %505 = vmatprep.subr.bf16.mxu0 0
        %506 = vmatpush1.bf16.msra.mxu0 %v277
        %507 = vmatprep.subr.bf16.mxu0 0
        %508 = vmatpush1.bf16.msra.mxu0 %v278
        %509 = vmatprep.subr.bf16.mxu0 0
        %510 = vmatpush1.bf16.msra.mxu0 %v279
        %511 = vmatprep.subr.bf16.mxu0 0
        %512 = vmatpush1.bf16.msra.mxu0 %v280
        %513 = vmatprep.subr.bf16.mxu0 0
        %514 = vmatpush1.bf16.msra.mxu0 0
        %515 = vmatprep.subr.bf16.mxu0 0
        %516 = vmatpush1.bf16.msra.mxu0 0
        %517 = vmatprep.subr.bf16.mxu0 0
        %518 = vmatpush1.bf16.msra.mxu0 0
        %519 = vmatprep.subr.bf16.mxu0 0
        %520 = vmatpush1.bf16.msra.mxu0 0
        %521 = vmatprep.subr.bf16.mxu0 0
        %522 = vmatpush1.bf16.msra.mxu0 0
        %523 = vmatprep.subr.bf16.mxu0 0
        %524 = vmatpush1.bf16.msra.mxu0 0
        %525 = vmatprep.subr.bf16.mxu0 0
        %526 = vmatpush1.bf16.msra.mxu0 0
        %527 = vmatprep.subr.bf16.mxu0 0
        %528 = vmatpush1.bf16.msra.mxu0 0
        %529 = vmatprep.subr.bf16.mxu0 0
        %530 = vmatpush1.bf16.msra.mxu0 0
        %531 = vmatprep.subr.bf16.mxu0 0
        %532 = vmatpush1.bf16.msra.mxu0 0
        %533 = vmatprep.subr.bf16.mxu0 0
        %534 = vmatpush1.bf16.msra.mxu0 0
        %535 = vmatprep.subr.bf16.mxu0 0
        %536 = vmatpush1.bf16.msra.mxu0 0
        %537 = vmatprep.mubr.bf16.mxu0 0
        %538 = vmatmul.mubr.bf16.gmra.mrb[0].mxu0 %v298
        %v539 = vpop.f32.mrb[0].mxu0
        %v540 = vadd.f32 0.0, %v539
        %v541 = vpop.f32.mrb[0].mxu0
        %v542 = vpop.f32.mrb[0].mxu0
        %v543 = vadd.f32 0.0, %v542
        %v544 = vpop.f32.mrb[0].mxu0
        %545 = vdwg.mxu0
        %546 = vmatprep.subr.bf16.mxu0 0
        %547 = vmatpush1.bf16.msra.mxu0 %v281
        %548 = vmatprep.subr.bf16.mxu0 0
        %549 = vmatpush1.bf16.msra.mxu0 %v282
        %550 = vmatprep.subr.bf16.mxu0 0
        %551 = vmatpush1.bf16.msra.mxu0 %v283
        %552 = vmatprep.subr.bf16.mxu0 0
        %553 = vmatpush1.bf16.msra.mxu0 %v284
        %554 = vmatprep.subr.bf16.mxu0 0
        %555 = vmatpush1.bf16.msra.mxu0 0
        %556 = vmatprep.subr.bf16.mxu0 0
        %557 = vmatpush1.bf16.msra.mxu0 0
        %558 = vmatprep.subr.bf16.mxu0 0
        %559 = vmatpush1.bf16.msra.mxu0 0
        %560 = vmatprep.subr.bf16.mxu0 0
        %561 = vmatpush1.bf16.msra.mxu0 0
        %562 = vmatprep.subr.bf16.mxu0 0
        %563 = vmatpush1.bf16.msra.mxu0 0
        %564 = vmatprep.subr.bf16.mxu0 0
        %565 = vmatpush1.bf16.msra.mxu0 0
        %566 = vmatprep.subr.bf16.mxu0 0
        %567 = vmatpush1.bf16.msra.mxu0 0
        %568 = vmatprep.subr.bf16.mxu0 0
        %569 = vmatpush1.bf16.msra.mxu0 0
        %570 = vmatprep.subr.bf16.mxu0 0
        %571 = vmatpush1.bf16.msra.mxu0 0
        %572 = vmatprep.subr.bf16.mxu0 0
        %573 = vmatpush1.bf16.msra.mxu0 0
        %574 = vmatprep.subr.bf16.mxu0 0
        %575 = vmatpush1.bf16.msra.mxu0 0
        %576 = vmatprep.subr.bf16.mxu0 0
        %577 = vmatpush1.bf16.msra.mxu0 0
        %578 = vmatprep.mubr.bf16.mxu0 0
        %579 = vmatmul.mubr.bf16.gmra.mrb[0].mxu0 %v298
        %v580 = vpop.f32.mrb[0].mxu0
        %v581 = vadd.f32 0.0, %v580
        %v582 = vpop.f32.mrb[0].mxu0
        %v583 = vpop.f32.mrb[0].mxu0
        %v584 = vadd.f32 0.0, %v583
        %v585 = vpop.f32.mrb[0].mxu0
        %586 = vdwg.mxu0
        %587 = vmatprep.subr.bf16.mxu0 0
        %588 = vmatpush1.bf16.msra.mxu0 %v285
        %589 = vmatprep.subr.bf16.mxu0 0
        %590 = vmatpush1.bf16.msra.mxu0 %v286
        %591 = vmatprep.subr.bf16.mxu0 0
        %592 = vmatpush1.bf16.msra.mxu0 %v287
        %593 = vmatprep.subr.bf16.mxu0 0
        %594 = vmatpush1.bf16.msra.mxu0 %v288
        %595 = vmatprep.subr.bf16.mxu0 0
        %596 = vmatpush1.bf16.msra.mxu0 0
        %597 = vmatprep.subr.bf16.mxu0 0
        %598 = vmatpush1.bf16.msra.mxu0 0
        %599 = vmatprep.subr.bf16.mxu0 0
        %600 = vmatpush1.bf16.msra.mxu0 0
        %601 = vmatprep.subr.bf16.mxu0 0
        %602 = vmatpush1.bf16.msra.mxu0 0
        %603 = vmatprep.subr.bf16.mxu0 0
        %604 = vmatpush1.bf16.msra.mxu0 0
        %605 = vmatprep.subr.bf16.mxu0 0
        %606 = vmatpush1.bf16.msra.mxu0 0
        %607 = vmatprep.subr.bf16.mxu0 0
        %608 = vmatpush1.bf16.msra.mxu0 0
        %609 = vmatprep.subr.bf16.mxu0 0
        %610 = vmatpush1.bf16.msra.mxu0 0
        %611 = vmatprep.subr.bf16.mxu0 0
        %612 = vmatpush1.bf16.msra.mxu0 0
        %613 = vmatprep.subr.bf16.mxu0 0
        %614 = vmatpush1.bf16.msra.mxu0 0
        %615 = vmatprep.subr.bf16.mxu0 0
        %616 = vmatpush1.bf16.msra.mxu0 0
        %617 = vmatprep.subr.bf16.mxu0 0
        %618 = vmatpush1.bf16.msra.mxu0 0
        %619 = vmatprep.mubr.bf16.mxu0 0
        %620 = vmatmul.mubr.bf16.gmra.mrb[0].mxu0 %v298
        %v621 = vpop.f32.mrb[0].mxu0
        %v622 = vadd.f32 0.0, %v621
        %v623 = vpop.f32.mrb[0].mxu0
        %v624 = vpop.f32.mrb[0].mxu0
        %v625 = vadd.f32 0.0, %v624
        %v626 = vpop.f32.mrb[0].mxu0
        %627 = vdwg.mxu0
        %v628 = vmul.f32 %v335, %v335
        %v629 = vmul.f32 %v338, %v338
        %v630 = vmul.f32 %v376, %v376
        %v631 = vmul.f32 %v379, %v379
        %v632 = vmul.f32 %v417, %v417
        %v633 = vmul.f32 %v420, %v420
        %v634 = vmul.f32 %v458, %v458
        %v635 = vmul.f32 %v461, %v461
        %v636 = vmul.f32 %v499, %v499
        %v637 = vmul.f32 %v502, %v502
        %v638 = vmul.f32 %v540, %v540
        %v639 = vmul.f32 %v543, %v543
        %v640 = vmul.f32 %v581, %v581
        %v641 = vmul.f32 %v584, %v584
        %v642 = vmul.f32 %v622, %v622
        %v643 = vmul.f32 %v625, %v625
        %644 = vadd.xlane.f32.xlu0 %v628
        %v645 = vpop.xlane.xlu0 %644
        %646 = vadd.xlane.f32.xlu0 %v629
        %v647 = vpop.xlane.xlu0 %646
        %648 = vadd.xlane.f32.xlu0 %v630
        %v649 = vpop.xlane.xlu0 %648
        %650 = vadd.xlane.f32.xlu0 %v631
        %v651 = vpop.xlane.xlu0 %650
        %652 = vadd.xlane.f32.xlu0 %v632
        %v653 = vpop.xlane.xlu0 %652
        %654 = vadd.xlane.f32.xlu0 %v633
        %v655 = vpop.xlane.xlu0 %654
        %656 = vadd.xlane.f32.xlu0 %v634
        %v657 = vpop.xlane.xlu0 %656
        %658 = vadd.xlane.f32.xlu0 %v635
        %v659 = vpop.xlane.xlu0 %658
        %660 = vadd.xlane.f32.xlu0 %v636
        %v661 = vpop.xlane.xlu0 %660
        %662 = vadd.xlane.f32.xlu0 %v637
        %v663 = vpop.xlane.xlu0 %662
        %664 = vadd.xlane.f32.xlu0 %v638
        %v665 = vpop.xlane.xlu0 %664
        %666 = vadd.xlane.f32.xlu0 %v639
        %v667 = vpop.xlane.xlu0 %666
        %668 = vadd.xlane.f32.xlu0 %v640
        %v669 = vpop.xlane.xlu0 %668
        %670 = vadd.xlane.f32.xlu0 %v641
        %v671 = vpop.xlane.xlu0 %670
        %672 = vadd.xlane.f32.xlu0 %v642
        %v673 = vpop.xlane.xlu0 %672
        %674 = vadd.xlane.f32.xlu0 %v643
        %v675 = vpop.xlane.xlu0 %674
        %v676 = vrcp.pop 128.0
        %v677 = vmul.f32 %v645, %v676
        %v678 = vmul.f32 %v647, %v676
        %v679 = vmul.f32 %v649, %v676
        %v680 = vmul.f32 %v651, %v676
        %v681 = vmul.f32 %v653, %v676
        %v682 = vmul.f32 %v655, %v676
        %v683 = vmul.f32 %v657, %v676
        %v684 = vmul.f32 %v659, %v676
        %v685 = vmul.f32 %v661, %v676
        %v686 = vmul.f32 %v663, %v676
        %v687 = vmul.f32 %v665, %v676
        %v688 = vmul.f32 %v667, %v676
        %v689 = vmul.f32 %v669, %v676
        %v690 = vmul.f32 %v671, %v676
        %v691 = vmul.f32 %v673, %v676
        %v692 = vmul.f32 %v675, %v676
        %v693 = vadd.f32 %v677, 1e-06
        %v694 = vadd.f32 %v678, 1e-06
        %v695 = vadd.f32 %v679, 1e-06
        %v696 = vadd.f32 %v680, 1e-06
        %v697 = vadd.f32 %v681, 1e-06
        %v698 = vadd.f32 %v682, 1e-06
        %v699 = vadd.f32 %v683, 1e-06
        %v700 = vadd.f32 %v684, 1e-06
        %v701 = vadd.f32 %v685, 1e-06
        %v702 = vadd.f32 %v686, 1e-06
        %v703 = vadd.f32 %v687, 1e-06
        %v704 = vadd.f32 %v688, 1e-06
        %v705 = vadd.f32 %v689, 1e-06
        %v706 = vadd.f32 %v690, 1e-06
        %v707 = vadd.f32 %v691, 1e-06
        %v708 = vadd.f32 %v692, 1e-06
        %v709 = vrsqrt.pop %v693
        %v710 = vrsqrt.pop %v694
        %v711 = vrsqrt.pop %v695
        %v712 = vrsqrt.pop %v696
        %v713 = vrsqrt.pop %v697
        %v714 = vrsqrt.pop %v698
        %v715 = vrsqrt.pop %v699
        %v716 = vrsqrt.pop %v700
        %v717 = vrsqrt.pop %v701
        %v718 = vrsqrt.pop %v702
        %v719 = vrsqrt.pop %v703
        %v720 = vrsqrt.pop %v704
        %v721 = vrsqrt.pop %v705
        %v722 = vrsqrt.pop %v706
        %v723 = vrsqrt.pop %v707
        %v724 = vrsqrt.pop %v708
        %v725 = vmul.f32 %v335, %v709
        %v726 = vmul.f32 %v338, %v710
        %v727 = vmul.f32 %v376, %v711
        %v728 = vmul.f32 %v379, %v712
        %v729 = vmul.f32 %v417, %v713
        %v730 = vmul.f32 %v420, %v714
        %v731 = vmul.f32 %v458, %v715
        %v732 = vmul.f32 %v461, %v716
        %v733 = vmul.f32 %v499, %v717
        %v734 = vmul.f32 %v502, %v718
        %v735 = vmul.f32 %v540, %v719
        %v736 = vmul.f32 %v543, %v720
        %v737 = vmul.f32 %v581, %v721
        %v738 = vmul.f32 %v584, %v722
        %v739 = vmul.f32 %v622, %v723
        %v740 = vmul.f32 %v625, %v724
        %v741 = vpack.c.bf16 %v726, %v725
        %v742 = vpack.c.bf16 %v728, %v727
        %v743 = vpack.c.bf16 %v730, %v729
        %v744 = vpack.c.bf16 %v732, %v731
        %v745 = vpack.c.bf16 %v734, %v733
        %v746 = vpack.c.bf16 %v736, %v735
        %v747 = vpack.c.bf16 %v738, %v737
        %v748 = vpack.c.bf16 %v740, %v739
        %v749 = vld [vmem:[%s2] sm:$0xff]
        %v750 = vld [vmem:[%s2 + $0x8] sm:$0xff]
        %v751 = vld [vmem:[%s2 + $0x10] sm:$0xff]
        %v752 = vld [vmem:[%s2 + $0x18] sm:$0xff]
        %v753 = vld [vmem:[%s2 + $0x20] sm:$0xff]
        %v754 = vld [vmem:[%s2 + $0x28] sm:$0xff]
        %v755 = vld [vmem:[%s2 + $0x30] sm:$0xff]
        %v756 = vld [vmem:[%s2 + $0x38] sm:$0xff]
        %v757 = vld [vmem:[%s2 + $0x40] sm:$0xff]
        %v758 = vld [vmem:[%s2 + $0x48] sm:$0xff]
        %v759 = vld [vmem:[%s2 + $0x50] sm:$0xff]
        %v760 = vld [vmem:[%s2 + $0x58] sm:$0xff]
        %v761 = vld [vmem:[%s2 + $0x60] sm:$0xff]
        %v762 = vld [vmem:[%s2 + $0x68] sm:$0xff]
        %v763 = vld [vmem:[%s2 + $0x70] sm:$0xff]
        %v764 = vld [vmem:[%s2 + $0x78] sm:$0xff]
        %v781 = vunpack.c.l.b16 %v749
        %v782 = vunpack.c.h.b16 %v749
        %v783 = vunpack.c.l.b16 %v750
        %v784 = vunpack.c.h.b16 %v750
        %v785 = vunpack.c.l.b16 %v751
        %v786 = vunpack.c.h.b16 %v751
        %v787 = vunpack.c.l.b16 %v752
        %v788 = vunpack.c.h.b16 %v752
        %v789 = vunpack.c.l.b16 %v753
        %v790 = vunpack.c.h.b16 %v753
        %v791 = vunpack.c.l.b16 %v754
        %v792 = vunpack.c.h.b16 %v754
        %v793 = vunpack.c.l.b16 %v755
        %v794 = vunpack.c.h.b16 %v755
        %v795 = vunpack.c.l.b16 %v756
        %v796 = vunpack.c.h.b16 %v756
        %v797 = vunpack.c.l.b16 %v757
        %v798 = vunpack.c.h.b16 %v757
        %v799 = vunpack.c.l.b16 %v758
        %v800 = vunpack.c.h.b16 %v758
        %v801 = vunpack.c.l.b16 %v759
        %v802 = vunpack.c.h.b16 %v759
        %v803 = vunpack.c.l.b16 %v760
        %v804 = vunpack.c.h.b16 %v760
        %v805 = vunpack.c.l.b16 %v761
        %v806 = vunpack.c.h.b16 %v761
        %v807 = vunpack.c.l.b16 %v762
        %v808 = vunpack.c.h.b16 %v762
        %v809 = vunpack.c.l.b16 %v763
        %v810 = vunpack.c.h.b16 %v763
        %v811 = vunpack.c.l.b16 %v764
        %v812 = vunpack.c.h.b16 %v764
        %v813 = vpack.c.b16 %v783, %v781
        %v814 = vpack.c.b16 %v784, %v782
        %v815 = vpack.c.b16 %v787, %v785
        %v816 = vpack.c.b16 %v788, %v786
        %v817 = vpack.c.b16 %v791, %v789
        %v818 = vpack.c.b16 %v792, %v790
        %v819 = vpack.c.b16 %v795, %v793
        %v820 = vpack.c.b16 %v796, %v794
        %v821 = vpack.c.b16 %v799, %v797
        %v822 = vpack.c.b16 %v800, %v798
        %v823 = vpack.c.b16 %v803, %v801
        %v824 = vpack.c.b16 %v804, %v802
        %v825 = vpack.c.b16 %v807, %v805
        %v826 = vpack.c.b16 %v808, %v806
        %v827 = vpack.c.b16 %v811, %v809
        %v828 = vpack.c.b16 %v812, %v810
        %845 = vmatprep.subr.bf16.mxu0 %v814
        %846 = vmatpush1.bf16.msra.mxu0 %v813
        %847 = vmatprep.subr.bf16.mxu0 %v816
        %848 = vmatpush1.bf16.msra.mxu0 %v815
        %849 = vmatprep.subr.bf16.mxu0 %v818
        %850 = vmatpush1.bf16.msra.mxu0 %v817
        %851 = vmatprep.subr.bf16.mxu0 %v820
        %852 = vmatpush1.bf16.msra.mxu0 %v819
        %853 = vmatprep.subr.bf16.mxu0 %v822
        %854 = vmatpush1.bf16.msra.mxu0 %v821
        %855 = vmatprep.subr.bf16.mxu0 %v824
        %856 = vmatpush1.bf16.msra.mxu0 %v823
        %857 = vmatprep.subr.bf16.mxu0 %v826
        %858 = vmatpush1.bf16.msra.mxu0 %v825
        %859 = vmatprep.subr.bf16.mxu0 %v828
        %860 = vmatpush1.bf16.msra.mxu0 %v827
        %861 = vmatprep.subr.bf16.mxu0 0
        %862 = vmatpush1.bf16.msra.mxu0 0
        %863 = vmatprep.subr.bf16.mxu0 0
        %864 = vmatpush1.bf16.msra.mxu0 0
        %865 = vmatprep.subr.bf16.mxu0 0
        %866 = vmatpush1.bf16.msra.mxu0 0
        %867 = vmatprep.subr.bf16.mxu0 0
        %868 = vmatpush1.bf16.msra.mxu0 0
        %869 = vmatprep.subr.bf16.mxu0 0
        %870 = vmatpush1.bf16.msra.mxu0 0
        %871 = vmatprep.subr.bf16.mxu0 0
        %872 = vmatpush1.bf16.msra.mxu0 0
        %873 = vmatprep.subr.bf16.mxu0 0
        %874 = vmatpush1.bf16.msra.mxu0 0
        %875 = vmatprep.subr.bf16.mxu0 0
        %876 = vmatpush1.bf16.msra.mxu0 0
        %877 = vmatprep.mubr.bf16.mxu0 0
        %878 = vmatmul.mubr.bf16.gmra.mrb[0].mxu0 %v741
        %v879 = vpop.f32.mrb[0].mxu0
        %v880 = vadd.f32 0.0, %v879
        %v881 = vpop.f32.mrb[0].mxu0
        %v882 = vadd.f32 0.0, %v881
        %v883 = vpop.f32.mrb[0].mxu0
        %v884 = vadd.f32 0.0, %v883
        %v885 = vpop.f32.mrb[0].mxu0
        %v886 = vadd.f32 0.0, %v885
        %887 = vmatprep.mubr.bf16.mxu0 0
        %888 = vmatmul.mubr.bf16.gmra.mrb[0].mxu0 %v742
        %v889 = vpop.f32.mrb[0].mxu0
        %v890 = vadd.f32 0.0, %v889
        %v891 = vpop.f32.mrb[0].mxu0
        %v892 = vadd.f32 0.0, %v891
        %v893 = vpop.f32.mrb[0].mxu0
        %v894 = vadd.f32 0.0, %v893
        %v895 = vpop.f32.mrb[0].mxu0
        %v896 = vadd.f32 0.0, %v895
        %897 = vmatprep.mubr.bf16.mxu0 0
        %898 = vmatmul.mubr.bf16.gmra.mrb[0].mxu0 %v743
        %v899 = vpop.f32.mrb[0].mxu0
        %v900 = vadd.f32 0.0, %v899
        %v901 = vpop.f32.mrb[0].mxu0
        %v902 = vadd.f32 0.0, %v901
        %v903 = vpop.f32.mrb[0].mxu0
        %v904 = vadd.f32 0.0, %v903
        %v905 = vpop.f32.mrb[0].mxu0
        %v906 = vadd.f32 0.0, %v905
        %907 = vmatprep.mubr.bf16.mxu0 0
        %908 = vmatmul.mubr.bf16.gmra.mrb[0].mxu0 %v744
        %v909 = vpop.f32.mrb[0].mxu0
        %v910 = vadd.f32 0.0, %v909
        %v911 = vpop.f32.mrb[0].mxu0
        %v912 = vadd.f32 0.0, %v911
        %v913 = vpop.f32.mrb[0].mxu0
        %v914 = vadd.f32 0.0, %v913
        %v915 = vpop.f32.mrb[0].mxu0
        %v916 = vadd.f32 0.0, %v915
        %917 = vmatprep.mubr.bf16.mxu0 0
        %918 = vmatmul.mubr.bf16.gmra.mrb[0].mxu0 %v745
        %v919 = vpop.f32.mrb[0].mxu0
        %v920 = vadd.f32 0.0, %v919
        %v921 = vpop.f32.mrb[0].mxu0
        %v922 = vadd.f32 0.0, %v921
        %v923 = vpop.f32.mrb[0].mxu0
        %v924 = vadd.f32 0.0, %v923
        %v925 = vpop.f32.mrb[0].mxu0
        %v926 = vadd.f32 0.0, %v925
        %927 = vmatprep.mubr.bf16.mxu0 0
        %928 = vmatmul.mubr.bf16.gmra.mrb[0].mxu0 %v746
        %v929 = vpop.f32.mrb[0].mxu0
        %v930 = vadd.f32 0.0, %v929
        %v931 = vpop.f32.mrb[0].mxu0
        %v932 = vadd.f32 0.0, %v931
        %v933 = vpop.f32.mrb[0].mxu0
        %v934 = vadd.f32 0.0, %v933
        %v935 = vpop.f32.mrb[0].mxu0
        %v936 = vadd.f32 0.0, %v935
        %937 = vmatprep.mubr.bf16.mxu0 0
        %938 = vmatmul.mubr.bf16.gmra.mrb[0].mxu0 %v747
        %v939 = vpop.f32.mrb[0].mxu0
        %v940 = vadd.f32 0.0, %v939
        %v941 = vpop.f32.mrb[0].mxu0
        %v942 = vadd.f32 0.0, %v941
        %v943 = vpop.f32.mrb[0].mxu0
        %v944 = vadd.f32 0.0, %v943
        %v945 = vpop.f32.mrb[0].mxu0
        %v946 = vadd.f32 0.0, %v945
        %947 = vmatprep.mubr.bf16.mxu0 0
        %948 = vmatmul.mubr.bf16.gmra.mrb[0].mxu0 %v748
        %v949 = vpop.f32.mrb[0].mxu0
        %v950 = vadd.f32 0.0, %v949
        %v951 = vpop.f32.mrb[0].mxu0
        %v952 = vadd.f32 0.0, %v951
        %v953 = vpop.f32.mrb[0].mxu0
        %v954 = vadd.f32 0.0, %v953
        %v955 = vpop.f32.mrb[0].mxu0
        %v956 = vadd.f32 0.0, %v955
        %957 = vdwg.mxu0
        %958 = vst [vmem:[%s189] sm:$0xff] %v880
        %959 = vst [vmem:[%s189 + $0x8] sm:$0xff] %v882
        %960 = vst [vmem:[%s189 + $0x10] sm:$0xff] %v884
        %961 = vst [vmem:[%s189 + $0x18] sm:$0xff] %v886
        %962 = vst [vmem:[%s189 + $0x20] sm:$0xff] %v890
        %963 = vst [vmem:[%s189 + $0x28] sm:$0xff] %v892
        %964 = vst [vmem:[%s189 + $0x30] sm:$0xff] %v894
        %965 = vst [vmem:[%s189 + $0x38] sm:$0xff] %v896
        %966 = vst [vmem:[%s189 + $0x40] sm:$0xff] %v900
        %967 = vst [vmem:[%s189 + $0x48] sm:$0xff] %v902
        %968 = vst [vmem:[%s189 + $0x50] sm:$0xff] %v904
        %969 = vst [vmem:[%s189 + $0x58] sm:$0xff] %v906
        %970 = vst [vmem:[%s189 + $0x60] sm:$0xff] %v910
        %971 = vst [vmem:[%s189 + $0x68] sm:$0xff] %v912
        %972 = vst [vmem:[%s189 + $0x70] sm:$0xff] %v914
        %973 = vst [vmem:[%s189 + $0x78] sm:$0xff] %v916
        %974 = vst [vmem:[%s189 + $0x80] sm:$0xff] %v920
        %975 = vst [vmem:[%s189 + $0x88] sm:$0xff] %v922
        %976 = vst [vmem:[%s189 + $0x90] sm:$0xff] %v924
        %977 = vst [vmem:[%s189 + $0x98] sm:$0xff] %v926
        %978 = vst [vmem:[%s189 + $0xa0] sm:$0xff] %v930
        %979 = vst [vmem:[%s189 + $0xa8] sm:$0xff] %v932
        %980 = vst [vmem:[%s189 + $0xb0] sm:$0xff] %v934
        %981 = vst [vmem:[%s189 + $0xb8] sm:$0xff] %v936
        %982 = vst [vmem:[%s189 + $0xc0] sm:$0xff] %v940
        %983 = vst [vmem:[%s189 + $0xc8] sm:$0xff] %v942
        %984 = vst [vmem:[%s189 + $0xd0] sm:$0xff] %v944
        %985 = vst [vmem:[%s189 + $0xd8] sm:$0xff] %v946
        %986 = vst [vmem:[%s189 + $0xe0] sm:$0xff] %v950
        %987 = vst [vmem:[%s189 + $0xe8] sm:$0xff] %v952
        %988 = vst [vmem:[%s189 + $0xf0] sm:$0xff] %v954
        %989 = vst [vmem:[%s189 + $0xf8] sm:$0xff] %v956
        %s990 = sand.u32 %s96, 1
        %s991 = scalar_lea.sflag [#allocation4], %s990
        %s992 = sand.u32 %s96, 1
        %s993 = smul.addr %s992, 256
        %s994 = scalar_lea.vmem [#allocation5], %s993
        // Predicated region
        $region37: #{gemma3_multimodal_projector.1} parent=31 // pred_check
          %p995 = pneg %p106
        $region38: #{gemma3_multimodal_projector.1} parent=31 // pred_check_branch
          %997 = sbr.rel (%p995) target = $region40
        $region39: #{gemma3_multimodal_projector.1} parent=31 // pred_region
          %s998 = smul.u32 8, %s20
          %s1000 = ssub.s32 4096, 4096
          %1001 = vsyncadd %s991, %s1000
          %s1002 = smul.addr %s998, 4
          %s1003 = smul.addr %s1002, 128
          %s1004 = scalar_lea.hbm %s3, %s1003
          %s1005 = sshll.u32 %s994, 4
          %s1006 = int_to_ptr.vmem [resolvable:$true] %s1005
          %1011 = dma.vmem_to_hbm [thread:$0]  %s1006, 4096, %s1004, %s991, 256, 256, 16
        $region40: #{gemma3_multimodal_projector.1} parent=31 // pred_fallthru
          _
      $region32: #{gemma3_multimodal_projector.1} parent=5 // pred_fallthru
        _
      %p1012 = scmp.le.s32.totalorder 2, %s15
      // Predicated region
      $region41: #{gemma3_multimodal_projector.1} parent=5 // pred_check
        %p1013 = pneg %p1012
      $region42: #{gemma3_multimodal_projector.1} parent=5 // pred_check_branch
        %1015 = sbr.rel (%p1013) target = $region44
      $region43: #{gemma3_multimodal_projector.1} parent=5 // pred_region
        %s1016 = ssub.s32 %s15, 2
        // Predicated region
        $region45: #{gemma3_multimodal_projector.1} parent=43 // pred_check
          %p1017 = pneg %p112
        $region46: #{gemma3_multimodal_projector.1} parent=43 // pred_check_branch
          %1019 = sbr.rel (%p1017) target = $region48
        $region47: #{gemma3_multimodal_projector.1} parent=43 // pred_region
          %s1020 = sand.u32 %s97, 1
          %s1021 = scalar_lea.sflag [#allocation4], %s1020
          %s1022 = sand.u32 %s97, 1
          %s1023 = smul.addr %s1022, 256
          %s1024 = scalar_lea.vmem [#allocation5], %s1023
          %1025 = dma.done %s1021, 4096
        $region48: #{gemma3_multimodal_projector.1} parent=43 // pred_fallthru
          _
      $region44: #{gemma3_multimodal_projector.1} parent=5 // pred_fallthru
        _
    $region6: #{gemma3_multimodal_projector.1} parent=1 // loop_footer
      %s19 = sadd.s32 1, %s15
    $region7: #{gemma3_multimodal_projector.1} parent=1 // loop_footer_branch
      %14 = sbr.rel target = $region3
    $region8: #{gemma3_multimodal_projector.1} parent=1 // loop_exit
      _
    %1026 = vsyncpa [#allocation3], 1
    %s1027 = scalar_lea.sflag [#allocation3], 1
    %1028 = vsyncpa %s1027, 1
    %1029 = vsyncpa [#allocation4], 1
    %s1030 = scalar_lea.sflag [#allocation4], 1
    %1031 = vsyncpa %s1030, 1

</llo_original>
